<compile_context>
chip_gen: v7x
topology: tpu7x:2x2x1
jax: 0.10.0
libtpu: 0.0.40
codegen_flags: <defaults>
</compile_context>

<pallas_src>
import numpy as np
import jax
import jax.numpy as jnp
from jax.experimental import pallas as pl
from jax.experimental.pallas import tpu as pltpu


# ----------------------------------------------------------------------------
# Model configuration (small deterministic stand-in sizes)
# ----------------------------------------------------------------------------
IMG_SIZE = 16        # image_encoder.img_size
PATCH = 8            # patch-embed kernel/stride
EMBED = 32           # image embedding dim
CLIP_DIM = 32        # clip feature dim
N_CLIP = 4           # decoder.n_patches (clip tokens)
UP = 4               # mask head per-token upsample factor
NUM_MASK_TOKENS = 4  # SAM-style: token 0 single-mask, 1..3 multimask
C_IN = 3             # RGB
GH = GW = IMG_SIZE // PATCH
N_TOK = GH * GW
CPP = C_IN * PATCH * PATCH
MASK_H = GH * UP
MASK_W = GW * UP
FUSED = N_TOK * EMBED            # 128 : flattened fused-token width (MXU-friendly K)

PIXEL_MEAN = np.array([123.675, 116.28, 103.53], dtype=np.float32)
PIXEL_STD = np.array([58.395, 57.12, 57.375], dtype=np.float32)


def _round_up(n, m=128):
    return ((n + m - 1) // m) * m


# ----------------------------------------------------------------------------
# Single fused kernel: image/clip/text -> fused tokens -> {logits+IoU slab,
# thresholded upsampled masks}.  All operands are full VMEM blocks (grid=(1,)).
# ----------------------------------------------------------------------------
def _fgctrl_fused_kernel(img_ref, clip_ref, text_ref,
                         wimg_ref, wclip_ref, wtext_ref, bfused_ref,
                         wslab_ref, bslab_ref, wbig_ref, bbig_ref,
                         slab_ref, mask_ref):
    # Fused tokens, flattened per batch row: (B, T*E = 128).
    # Pixel normalization / padding / patch extraction / patch embed are all
    # inside wimg; the clip pooling (mean over N_CLIP tokens) is inside wclip;
    # the clip positional-embedding mean + all biases are inside bfused.
    fused = (jnp.dot(img_ref[...], wimg_ref[...], preferred_element_type=jnp.float32)
             + jnp.dot(clip_ref[...], wclip_ref[...], preferred_element_type=jnp.float32)
             + jnp.dot(text_ref[...], wtext_ref[...], preferred_element_type=jnp.float32)
             + bfused_ref[...])

    # Slab = [grid-ordered low-res mask logits | IoU predictions | zero pad].
    # (mask head composed with the token->grid scatter; IoU head composed with
    #  the token mean-pool.)  Lane-dense (multiple of 128).
    slab_ref[...] = (jnp.dot(fused, wslab_ref[...],
                             preferred_element_type=jnp.float32) + bslab_ref[...])

    # Upsampled masks = mask head composed with scatter + resize->crop->resize
    # (Kronecker bilinear matrix), thresholded at 0.  Lane-dense int8 output.
    up = (jnp.dot(fused, wbig_ref[...],
                  preferred_element_type=jnp.float32) + bbig_ref[...])
    mask_ref[...] = (up > 0.0).astype(jnp.int8)


def run_fgctrl_fused(img_flat, clip_flat, text,
                     wimg, wclip, wtext, bfused, wslab, bslab, wbig, bbig):
    B = img_flat.shape[0]
    logit_pad = wslab.shape[1]
    mask_pad = wbig.shape[1]

    def full(arr):
        return pl.BlockSpec(arr.shape, lambda i, nd=arr.ndim: (0,) * nd)

    ins = (img_flat, clip_flat, text, wimg, wclip, wtext, bfused,
           wslab, bslab, wbig, bbig)
    slab, masks = pl.pallas_call(
        _fgctrl_fused_kernel,
        out_shape=(jax.ShapeDtypeStruct((B, logit_pad), jnp.float32),
                   jax.ShapeDtypeStruct((B, mask_pad), jnp.int8)),
        grid=(1,),
        in_specs=[full(a) for a in ins],
        out_specs=(pl.BlockSpec((B, logit_pad), lambda i: (0, 0)),
                   pl.BlockSpec((B, mask_pad), lambda i: (0, 0))),
        compiler_params=pltpu.CompilerParams(
            dimension_semantics=("arbitrary",)),   # single step; no 2-TC split
    )(*ins)
    return slab, masks


# ----------------------------------------------------------------------------
# Trace-time constant tensors (numpy)
# ----------------------------------------------------------------------------
def _bilinear_matrix_np(in_size, out_size):
    """Row-interp matrix for F.interpolate(mode='bilinear', align_corners=False)."""
    scale = in_size / out_size
    i = np.arange(out_size, dtype=np.float64)
    src = np.maximum((i + 0.5) * scale - 0.5, 0.0)
    i0 = np.minimum(np.floor(src).astype(np.int64), in_size - 1)
    frac = src - i0
    i1 = np.minimum(i0 + 1, in_size - 1)
    R = np.zeros((out_size, in_size), dtype=np.float32)
    np.add.at(R, (np.arange(out_size), i0), (1.0 - frac).astype(np.float32))
    np.add.at(R, (np.arange(out_size), i1), frac.astype(np.float32))
    return R


def _composite_resize_matrix(mask_size, img_size, input_size, original_size):
    """resize(mask_size -> img_size) -> crop[:input_size] -> resize(-> original_size)."""
    A = _bilinear_matrix_np(mask_size, img_size)[:input_size, :]   # (in, mask)
    B = _bilinear_matrix_np(input_size, original_size)             # (orig, in)
    return (B @ A).astype(np.float32)                              # (orig, mask)


def _patch_extract_tensor(H, W):
    """S3[q, t, p] = 1/std[c]: raw flattened pixel q=(c,i,j) -> token t, in-patch p.
    Pixels outside HxW never appear (zero-padding of the normalized image)."""
    S3 = np.zeros((C_IN * H * W, N_TOK, CPP), dtype=np.float32)
    for c in range(C_IN):
        inv = 1.0 / PIXEL_STD[c]
        for i in range(H):
            for j in range(W):
                t = (i // PATCH) * GW + (j // PATCH)
                p = c * PATCH * PATCH + (i % PATCH) * PATCH + (j % PATCH)
                S3[c * H * W + i * W + j, t, p] = inv
    return S3


def _grid_scatter_tensor():
    """G[t, k, pos] = 1: per-token UP x UP logit k of token t -> grid position pos."""
    G = np.zeros((N_TOK, UP * UP, MASK_H * MASK_W), dtype=np.float32)
    for i in range(MASK_H):
        for j in range(MASK_W):
            t = (i // UP) * GW + (j // UP)
            k = (i % UP) * UP + (j % UP)
            G[t, k, i * MASK_W + j] = 1.0
    return G


# ----------------------------------------------------------------------------
# Weight pre-composition (do once per (params, H, W, multimask); cacheable)
# ----------------------------------------------------------------------------
def precompose_weights(params, clip_pe, H, W, multimask_output):
    sel = np.arange(1, 4) if multimask_output else np.arange(0, 1)
    n_out = int(sel.size)
    n_grid = n_out * MASK_H * MASK_W
    n_pix = n_out * H * W

    # constant structure tensors
    S3 = _patch_extract_tensor(H, W)                       # (C*H*W, T, CPP)
    G = _grid_scatter_tensor()                             # (T, UP*UP, 64)
    RH = _composite_resize_matrix(MASK_H, IMG_SIZE, H, H)  # (H, MASK_H)
    RW = _composite_resize_matrix(MASK_W, IMG_SIZE, W, W)  # (W, MASK_W)
    RK = np.kron(RH, RW).astype(np.float32)                # (H*W, MASK_H*MASK_W)
    mean_flat = np.repeat(PIXEL_MEAN, H * W).astype(np.float32)   # (C*H*W,)

    # --- image / clip / text -> flattened fused tokens (B, T*E) --------------
    # normalization scale + padding + patch extraction + patch embed:
    w_img = jnp.einsum('qtp,pe->qte', S3, params["patch_w"]).reshape(C_IN * H * W, FUSED)
    # mean shift folded into bias (matches "normalize then zero-pad" reference):
    b_img = jnp.tile(params["patch_b"], N_TOK) - jnp.asarray(mean_flat) @ w_img
    # clip positional-embedding mean folded through clip_w into one bias:
    bct = (params["clip_b"] + params["text_b"]
           + jnp.mean(clip_pe, axis=0) @ params["clip_w"])
    b_fused = (b_img + jnp.tile(bct, N_TOK))[None, :]                 # (1, T*E)
    # clip pooling (mean over N_CLIP tokens) folded into the projection:
    w_clip = jnp.tile(params["clip_w"], (N_CLIP, N_TOK)) / N_CLIP     # (N_CLIP*C, T*E)
    w_text = jnp.tile(params["text_w"], (1, N_TOK))                   # (C, T*E)

    # --- mask head composed with token->grid scatter (low-res logits) --------
    mw3 = params["mask_w"].reshape(EMBED, NUM_MASK_TOKENS, UP * UP)[:, sel, :]
    mb2 = params["mask_b"].reshape(NUM_MASK_TOKENS, UP * UP)[sel, :]
    gridw = jnp.einsum('emk,tkp->temp', mw3, G).reshape(FUSED, n_grid)
    gridb = jnp.einsum('mk,tkp->mp', mb2, G).reshape(n_grid)

    # --- IoU head composed with token mean-pool; folded into the same slab ---
    iouw = jnp.tile(params["iou_w"][:, sel], (N_TOK, 1)) / N_TOK      # (T*E, n_out)
    ioub = params["iou_b"][sel]

    n_slab = n_grid + n_out
    logit_pad = _round_up(n_slab)
    w_slab = jnp.pad(jnp.concatenate([gridw, iouw], axis=1),
                     ((0, 0), (0, logit_pad - n_slab)))
    b_slab = jnp.pad(jnp.concatenate([gridb, ioub]), (0, logit_pad - n_slab))[None, :]

    # --- mask head further composed with resize->crop->resize (postprocess) --
    bigw = jnp.einsum('fmp,qp->fmq',
                      gridw.reshape(FUSED, n_out, MASK_H * MASK_W), RK
                      ).reshape(FUSED, n_pix)
    bigb = jnp.einsum('mp,qp->mq',
                      gridb.reshape(n_out, MASK_H * MASK_W), RK).reshape(n_pix)
    mask_pad = _round_up(n_pix)
    w_big = jnp.pad(bigw, ((0, 0), (0, mask_pad - n_pix)))
    b_big = jnp.pad(bigb, (0, mask_pad - n_pix))[None, :]

    return dict(n_out=n_out, w_img=w_img, w_clip=w_clip, w_text=w_text,
                b_fused=b_fused, w_slab=w_slab, b_slab=b_slab,
                w_big=w_big, b_big=b_big)


# ----------------------------------------------------------------------------
# Deterministic parameters
# ----------------------------------------------------------------------------
def init_params(key):
    ks = jax.random.split(key, 10)
    s = 0.02
    return {
        "patch_w": jax.random.normal(ks[0], (CPP, EMBED), jnp.float32) * s,
        "patch_b": jax.random.normal(ks[1], (EMBED,), jnp.float32) * s,
        "clip_w": jax.random.normal(ks[2], (CLIP_DIM, EMBED), jnp.float32) * s,
        "clip_b": jax.random.normal(ks[3], (EMBED,), jnp.float32) * s,
        "text_w": jax.random.normal(ks[4], (CLIP_DIM, EMBED), jnp.float32) * s,
        "text_b": jax.random.normal(ks[5], (EMBED,), jnp.float32) * s,
        "mask_w": jax.random.normal(ks[6], (EMBED, NUM_MASK_TOKENS * UP * UP), jnp.float32) * s,
        "mask_b": jax.random.normal(ks[7], (NUM_MASK_TOKENS * UP * UP,), jnp.float32) * s,
        "iou_w": jax.random.normal(ks[8], (EMBED, NUM_MASK_TOKENS), jnp.float32) * s,
        "iou_b": jax.random.normal(ks[9], (NUM_MASK_TOKENS,), jnp.float32) * s,
    }


# ----------------------------------------------------------------------------
# Forward pass
# ----------------------------------------------------------------------------
def fgctrl_clip_sam_forward(params, image, clip_embedding, text_embedding,
                            clip_pe, multimask_output=False):
    B, C, H, W = image.shape
    assert C == C_IN and H <= IMG_SIZE and W <= IMG_SIZE

    # TODO(synk): full ImageEncoderViT transformer blocks / ClipEncoder PIL &
    # caption tokenization are not defined in the reference file; only the
    # dense hot paths (patch embed, projections, fusion, heads, postprocess)
    # are implemented.
    cw = precompose_weights(params, clip_pe, H, W, multimask_output)
    n_out = cw["n_out"]

    # Only layout-free flattening reshapes on the inputs; everything else runs
    # inside the single fused kernel.
    img_flat = image.reshape(B, C * H * W)
    clip_flat = clip_embedding.reshape(B, N_CLIP * CLIP_DIM)

    slab, mask_i8 = run_fgctrl_fused(
        img_flat, clip_flat, text_embedding,
        cw["w_img"], cw["w_clip"], cw["w_text"], cw["b_fused"],
        cw["w_slab"], cw["b_slab"], cw["w_big"], cw["b_big"])

    # Slice lane-padding off the outputs (tiny, KB-scale).
    n_grid = n_out * MASK_H * MASK_W
    mask_logits = slab[:, :n_grid].reshape(B, n_out, MASK_H, MASK_W)
    iou_predictions = slab[:, n_grid:n_grid + n_out]
    masks = mask_i8[:, :n_out * H * W].reshape(B, n_out, H, W).astype(jnp.bool_)

    return {"masks": masks, "iou_predictions": iou_predictions, "logits": mask_logits}


# ----------------------------------------------------------------------------
if __name__ == "__main__":
    key = jax.random.PRNGKey(0)
    kp, ki, kc, kt, ke = jax.random.split(key, 5)

    params = init_params(kp)

    B, H, W = 2, 14, 12                      # small, non-square to exercise padding
    image = jax.random.uniform(ki, (B, C_IN, H, W), jnp.float32, 0.0, 255.0)
    clip_embedding = jax.random.normal(kc, (B, N_CLIP, CLIP_DIM), jnp.float32)
    text_embedding = jax.random.normal(kt, (B, CLIP_DIM), jnp.float32)
    clip_pe = jax.random.normal(ke, (N_CLIP, CLIP_DIM), jnp.float32)

    forward = jax.jit(fgctrl_clip_sam_forward, static_argnames=("multimask_output",))

    out = forward(params, image, clip_embedding, text_embedding, clip_pe,
                  multimask_output=False)
    jax.block_until_ready(out)
    assert out["masks"].shape == (B, 1, H, W) and out["masks"].dtype == jnp.bool_
    assert out["iou_predictions"].shape == (B, 1)
    assert out["logits"].shape == (B, 1, MASK_H, MASK_W)

    out_mm = forward(params, image, clip_embedding, text_embedding, clip_pe,
                     multimask_output=True)
    jax.block_until_ready(out_mm)
    assert out_mm["masks"].shape == (B, 3, H, W) and out_mm["masks"].dtype == jnp.bool_
    assert out_mm["iou_predictions"].shape == (B, 3)
    assert out_mm["logits"].shape == (B, 3, MASK_H, MASK_W)

    print("KERNEL_OK")
</pallas_src>

<mosaic_0001>
module attributes {stable_mosaic.version = 11 : i64} {
  func.func @_fgctrl_fused_kernel(%arg0: i32, %arg1: memref<2x504xf32, #tpu.memory_space<vmem>>, %arg2: memref<2x128xf32, #tpu.memory_space<vmem>>, %arg3: memref<2x32xf32, #tpu.memory_space<vmem>>, %arg4: memref<504x128xf32, #tpu.memory_space<vmem>>, %arg5: memref<128x128xf32, #tpu.memory_space<vmem>>, %arg6: memref<32x128xf32, #tpu.memory_space<vmem>>, %arg7: memref<1x128xf32, #tpu.memory_space<vmem>>, %arg8: memref<128x128xf32, #tpu.memory_space<vmem>>, %arg9: memref<1x128xf32, #tpu.memory_space<vmem>>, %arg10: memref<128x256xf32, #tpu.memory_space<vmem>>, %arg11: memref<1x256xf32, #tpu.memory_space<vmem>>, %arg12: memref<2x128xf32, #tpu.memory_space<vmem>>, %arg13: memref<2x256xi8, #tpu.memory_space<vmem>>) attributes {dimension_semantics = [#tpu.dimension_semantics<arbitrary>], iteration_bounds = array<i64: 1>, scalar_prefetch = 0 : i64, scratch_operands = 0 : i64, tpu.core_type = #tpu.core_type<tc>, window_params = [{pipeline_mode = #tpu.pipeline_mode<synchronous>, transform_indices = @transform_0, window_bounds = array<i64: 2, 504>}, {pipeline_mode = #tpu.pipeline_mode<synchronous>, transform_indices = @transform_1, window_bounds = array<i64: 2, 128>}, {pipeline_mode = #tpu.pipeline_mode<synchronous>, transform_indices = @transform_2, window_bounds = array<i64: 2, 32>}, {pipeline_mode = #tpu.pipeline_mode<synchronous>, transform_indices = @transform_3, window_bounds = array<i64: 504, 128>}, {pipeline_mode = #tpu.pipeline_mode<synchronous>, transform_indices = @transform_4, window_bounds = array<i64: 128, 128>}, {pipeline_mode = #tpu.pipeline_mode<synchronous>, transform_indices = @transform_5, window_bounds = array<i64: 32, 128>}, {pipeline_mode = #tpu.pipeline_mode<synchronous>, transform_indices = @transform_6, window_bounds = array<i64: 1, 128>}, {pipeline_mode = #tpu.pipeline_mode<synchronous>, transform_indices = @transform_7, window_bounds = array<i64: 128, 128>}, {pipeline_mode = #tpu.pipeline_mode<synchronous>, transform_indices = @transform_8, window_bounds = array<i64: 1, 128>}, {pipeline_mode = #tpu.pipeline_mode<synchronous>, transform_indices = @transform_9, window_bounds = array<i64: 128, 256>}, {pipeline_mode = #tpu.pipeline_mode<synchronous>, transform_indices = @transform_10, window_bounds = array<i64: 1, 256>}, {pipeline_mode = #tpu.pipeline_mode<synchronous>, transform_indices = @transform_11, window_bounds = array<i64: 2, 128>}, {pipeline_mode = #tpu.pipeline_mode<synchronous>, transform_indices = @transform_12, window_bounds = array<i64: 2, 256>}]} {
    %c0 = arith.constant 0 : index
    %c0_0 = arith.constant 0 : index
    %0 = vector.load %arg1[%c0, %c0_0] : memref<2x504xf32, #tpu.memory_space<vmem>>, vector<2x504xf32>
    %c0_1 = arith.constant 0 : index
    %c0_2 = arith.constant 0 : index
    %1 = vector.load %arg4[%c0_1, %c0_2] : memref<504x128xf32, #tpu.memory_space<vmem>>, vector<504x128xf32>
    %cst = arith.constant dense<0.000000e+00> : vector<2x128xf32>
    %2 = tpu.matmul %0, %1, %cst {dimension_numbers = #tpu.dot_dimension_numbers<[1], [0], [0], [1], [0, 0, 1, 1], [], []>} : vector<2x504xf32>, vector<504x128xf32>, vector<2x128xf32> -> vector<2x128xf32>
    %c0_3 = arith.constant 0 : index
    %c0_4 = arith.constant 0 : index
    %3 = vector.load %arg2[%c0_3, %c0_4] : memref<2x128xf32, #tpu.memory_space<vmem>>, vector<2x128xf32>
    %c0_5 = arith.constant 0 : index
    %c0_6 = arith.constant 0 : index
    %4 = vector.load %arg5[%c0_5, %c0_6] : memref<128x128xf32, #tpu.memory_space<vmem>>, vector<128x128xf32>
    %cst_7 = arith.constant dense<0.000000e+00> : vector<2x128xf32>
    %5 = tpu.matmul %3, %4, %cst_7 {dimension_numbers = #tpu.dot_dimension_numbers<[1], [0], [0], [1], [0, 0, 1, 1], [], []>} : vector<2x128xf32>, vector<128x128xf32>, vector<2x128xf32> -> vector<2x128xf32>
    %6 = arith.addf %2, %5 : vector<2x128xf32>
    %c0_8 = arith.constant 0 : index
    %c0_9 = arith.constant 0 : index
    %7 = vector.load %arg3[%c0_8, %c0_9] : memref<2x32xf32, #tpu.memory_space<vmem>>, vector<2x32xf32>
    %c0_10 = arith.constant 0 : index
    %c0_11 = arith.constant 0 : index
    %8 = vector.load %arg6[%c0_10, %c0_11] : memref<32x128xf32, #tpu.memory_space<vmem>>, vector<32x128xf32>
    %cst_12 = arith.constant dense<0.000000e+00> : vector<2x128xf32>
    %9 = tpu.matmul %7, %8, %cst_12 {dimension_numbers = #tpu.dot_dimension_numbers<[1], [0], [0], [1], [0, 0, 1, 1], [], []>} : vector<2x32xf32>, vector<32x128xf32>, vector<2x128xf32> -> vector<2x128xf32>
    %10 = arith.addf %6, %9 : vector<2x128xf32>
    %c0_13 = arith.constant 0 : index
    %c0_14 = arith.constant 0 : index
    %11 = vector.load %arg7[%c0_13, %c0_14] : memref<1x128xf32, #tpu.memory_space<vmem>>, vector<1x128xf32>
    %12 = vector.broadcast %11 : vector<1x128xf32> to vector<2x128xf32>
    %13 = arith.addf %10, %12 : vector<2x128xf32>
    %c0_15 = arith.constant 0 : index
    %c0_16 = arith.constant 0 : index
    %14 = vector.load %arg8[%c0_15, %c0_16] : memref<128x128xf32, #tpu.memory_space<vmem>>, vector<128x128xf32>
    %cst_17 = arith.constant dense<0.000000e+00> : vector<2x128xf32>
    %15 = tpu.matmul %13, %14, %cst_17 {dimension_numbers = #tpu.dot_dimension_numbers<[1], [0], [0], [1], [0, 0, 1, 1], [], []>} : vector<2x128xf32>, vector<128x128xf32>, vector<2x128xf32> -> vector<2x128xf32>
    %c0_18 = arith.constant 0 : index
    %c0_19 = arith.constant 0 : index
    %16 = vector.load %arg9[%c0_18, %c0_19] : memref<1x128xf32, #tpu.memory_space<vmem>>, vector<1x128xf32>
    %17 = vector.broadcast %16 : vector<1x128xf32> to vector<2x128xf32>
    %18 = arith.addf %15, %17 : vector<2x128xf32>
    %c0_20 = arith.constant 0 : index
    %c0_21 = arith.constant 0 : index
    %19 = vector.load %arg12[%c0_20, %c0_21] : memref<2x128xf32, #tpu.memory_space<vmem>>, vector<2x128xf32>
    tpu.vector_store %arg12[%c0_20, %c0_21], %18 {strides = array<i32>} : memref<2x128xf32, #tpu.memory_space<vmem>>, vector<2x128xf32>,
    %c0_22 = arith.constant 0 : index
    %c0_23 = arith.constant 0 : index
    %20 = vector.load %arg10[%c0_22, %c0_23] : memref<128x256xf32, #tpu.memory_space<vmem>>, vector<128x256xf32>
    %cst_24 = arith.constant dense<0.000000e+00> : vector<2x256xf32>
    %21 = tpu.matmul %13, %20, %cst_24 {dimension_numbers = #tpu.dot_dimension_numbers<[1], [0], [0], [1], [0, 0, 1, 1], [], []>} : vector<2x128xf32>, vector<128x256xf32>, vector<2x256xf32> -> vector<2x256xf32>
    %c0_25 = arith.constant 0 : index
    %c0_26 = arith.constant 0 : index
    %22 = vector.load %arg11[%c0_25, %c0_26] : memref<1x256xf32, #tpu.memory_space<vmem>>, vector<1x256xf32>
    %23 = vector.broadcast %22 : vector<1x256xf32> to vector<2x256xf32>
    %24 = arith.addf %21, %23 : vector<2x256xf32>
    %cst_27 = arith.constant 0.000000e+00 : f32
    %25 = vector.broadcast %cst_27 : f32 to vector<2x256xf32>
    %26 = arith.cmpf ogt, %24, %25 : vector<2x256xf32>
    %27 = arith.extui %26 : vector<2x256xi1> to vector<2x256xi8>
    %c0_28 = arith.constant 0 : index
    %c0_29 = arith.constant 0 : index
    %28 = vector.load %arg13[%c0_28, %c0_29] : memref<2x256xi8, #tpu.memory_space<vmem>>, vector<2x256xi8>
    tpu.vector_store %arg13[%c0_28, %c0_29], %27 {strides = array<i32>} : memref<2x256xi8, #tpu.memory_space<vmem>>, vector<2x256xi8>,
    return
  }
  func.func @transform_0(%arg0: i32) -> (i32, i32) {
    %c0_i32 = arith.constant 0 : i32
    %c0_i32_0 = arith.constant 0 : i32
    %c0_i32_1 = arith.constant 0 : i32
    return %c0_i32, %c0_i32_0 : i32, i32
  }
  func.func @transform_1(%arg0: i32) -> (i32, i32) {
    %c0_i32 = arith.constant 0 : i32
    %c0_i32_0 = arith.constant 0 : i32
    %c0_i32_1 = arith.constant 0 : i32
    return %c0_i32, %c0_i32_0 : i32, i32
  }
  func.func @transform_2(%arg0: i32) -> (i32, i32) {
    %c0_i32 = arith.constant 0 : i32
    %c0_i32_0 = arith.constant 0 : i32
    %c0_i32_1 = arith.constant 0 : i32
    return %c0_i32, %c0_i32_0 : i32, i32
  }
  func.func @transform_3(%arg0: i32) -> (i32, i32) {
    %c0_i32 = arith.constant 0 : i32
    %c0_i32_0 = arith.constant 0 : i32
    %c0_i32_1 = arith.constant 0 : i32
    return %c0_i32, %c0_i32_0 : i32, i32
  }
  func.func @transform_4(%arg0: i32) -> (i32, i32) {
    %c0_i32 = arith.constant 0 : i32
    %c0_i32_0 = arith.constant 0 : i32
    %c0_i32_1 = arith.constant 0 : i32
    return %c0_i32, %c0_i32_0 : i32, i32
  }
  func.func @transform_5(%arg0: i32) -> (i32, i32) {
    %c0_i32 = arith.constant 0 : i32
    %c0_i32_0 = arith.constant 0 : i32
    %c0_i32_1 = arith.constant 0 : i32
    return %c0_i32, %c0_i32_0 : i32, i32
  }
  func.func @transform_6(%arg0: i32) -> (i32, i32) {
    %c0_i32 = arith.constant 0 : i32
    %c0_i32_0 = arith.constant 0 : i32
    %c0_i32_1 = arith.constant 0 : i32
    return %c0_i32, %c0_i32_0 : i32, i32
  }
  func.func @transform_7(%arg0: i32) -> (i32, i32) {
    %c0_i32 = arith.constant 0 : i32
    %c0_i32_0 = arith.constant 0 : i32
    %c0_i32_1 = arith.constant 0 : i32
    return %c0_i32, %c0_i32_0 : i32, i32
  }
  func.func @transform_8(%arg0: i32) -> (i32, i32) {
    %c0_i32 = arith.constant 0 : i32
    %c0_i32_0 = arith.constant 0 : i32
    %c0_i32_1 = arith.constant 0 : i32
    return %c0_i32, %c0_i32_0 : i32, i32
  }
  func.func @transform_9(%arg0: i32) -> (i32, i32) {
    %c0_i32 = arith.constant 0 : i32
    %c0_i32_0 = arith.constant 0 : i32
    %c0_i32_1 = arith.constant 0 : i32
    return %c0_i32, %c0_i32_0 : i32, i32
  }
  func.func @transform_10(%arg0: i32) -> (i32, i32) {
    %c0_i32 = arith.constant 0 : i32
    %c0_i32_0 = arith.constant 0 : i32
    %c0_i32_1 = arith.constant 0 : i32
    return %c0_i32, %c0_i32_0 : i32, i32
  }
  func.func @transform_11(%arg0: i32) -> (i32, i32) {
    %c0_i32 = arith.constant 0 : i32
    %c0_i32_0 = arith.constant 0 : i32
    %c0_i32_1 = arith.constant 0 : i32
    return %c0_i32, %c0_i32_0 : i32, i32
  }
  func.func @transform_12(%arg0: i32) -> (i32, i32) {
    %c0_i32 = arith.constant 0 : i32
    %c0_i32_0 = arith.constant 0 : i32
    %c0_i32_1 = arith.constant 0 : i32
    return %c0_i32, %c0_i32_0 : i32, i32
  }
}

</mosaic_0001>

<llo_original>
// kernel: tile.33
$region0: #{tile.33}
  #allocation0 [shape = 's32[1]{0}', space=sflag, size = 0x4, scoped, tag = 'scoped memory for tile.33']
  %s0 = inlined_call_operand.vmem [shape: f32[32], index: 0, kind: input, shape index: {}]
  %s1 = inlined_call_operand.vmem [shape: f32[4,32], index: 1, kind: output, shape index: {}]
  // Predicated region
  $region2: #{tile.33} parent=0 // pred_check
    _
  $region3: #{tile.33} parent=0 // pred_check_branch
    %3 = sbr.rel (0) target = $region5
  $region4: #{tile.33} parent=0 // pred_region
    _
  $region5: #{tile.33} parent=0 // pred_fallthru
    _
  %v4 = vld [vmem:[%s0] ss:$0 sm:$0xff]
  %5 = vst [vmem:[%s1] sm:$0xf] %v4

// kernel: tile.44
$region0: #{tile.44}
  %s0 = inlined_call_operand.vmem [shape: f32[32,4,32], index: 0, kind: input, shape index: {}]
  %s1 = inlined_call_operand.vmem [shape: f32[32,128], index: 1, kind: output, shape index: {}]
  $region1: #{tile.44} parent=0
    #allocation0 [shape = 'u8[131072]{0}', space=vmem, size = 0x20000, scoped, tag = 'scoped mem for input reshape']
    %s3 = sshllo.u32 0, 4
    %s4 = smul.addr 4, 31
    %s5 = scalar_lea.vmem %s0, %s4
    %v6 = vld [vmem:[%s5] sm:%s3]
    %s7 = scalar_lea.vmem [#allocation0], 248
    %8 = vst [vmem:[%s7] sm:%s3] %v6
    %s9 = smul.addr 4, 30
    %s10 = scalar_lea.vmem %s0, %s9
    %v11 = vld [vmem:[%s10] sm:%s3]
    %s12 = scalar_lea.vmem [#allocation0], 240
    %13 = vst [vmem:[%s12] sm:%s3] %v11
    %s14 = smul.addr 4, 29
    %s15 = scalar_lea.vmem %s0, %s14
    %v16 = vld [vmem:[%s15] sm:%s3]
    %s17 = scalar_lea.vmem [#allocation0], 232
    %18 = vst [vmem:[%s17] sm:%s3] %v16
    %s19 = smul.addr 4, 28
    %s20 = scalar_lea.vmem %s0, %s19
    %v21 = vld [vmem:[%s20] sm:%s3]
    %s22 = scalar_lea.vmem [#allocation0], 224
    %23 = vst [vmem:[%s22] sm:%s3] %v21
    %s24 = smul.addr 4, 27
    %s25 = scalar_lea.vmem %s0, %s24
    %v26 = vld [vmem:[%s25] sm:%s3]
    %s27 = scalar_lea.vmem [#allocation0], 216
    %28 = vst [vmem:[%s27] sm:%s3] %v26
    %s29 = smul.addr 4, 26
    %s30 = scalar_lea.vmem %s0, %s29
    %v31 = vld [vmem:[%s30] sm:%s3]
    %s32 = scalar_lea.vmem [#allocation0], 208
    %33 = vst [vmem:[%s32] sm:%s3] %v31
    %s34 = smul.addr 4, 25
    %s35 = scalar_lea.vmem %s0, %s34
    %v36 = vld [vmem:[%s35] sm:%s3]
    %s37 = scalar_lea.vmem [#allocation0], 200
    %38 = vst [vmem:[%s37] sm:%s3] %v36
    %s39 = smul.addr 4, 24
    %s40 = scalar_lea.vmem %s0, %s39
    %v41 = vld [vmem:[%s40] sm:%s3]
    %s42 = scalar_lea.vmem [#allocation0], 192
    %43 = vst [vmem:[%s42] sm:%s3] %v41
    %s44 = smul.addr 4, 23
    %s45 = scalar_lea.vmem %s0, %s44
    %v46 = vld [vmem:[%s45] sm:%s3]
    %s47 = scalar_lea.vmem [#allocation0], 184
    %48 = vst [vmem:[%s47] sm:%s3] %v46
    %s49 = smul.addr 4, 22
    %s50 = scalar_lea.vmem %s0, %s49
    %v51 = vld [vmem:[%s50] sm:%s3]
    %s52 = scalar_lea.vmem [#allocation0], 176
    %53 = vst [vmem:[%s52] sm:%s3] %v51
    %s54 = smul.addr 4, 21
    %s55 = scalar_lea.vmem %s0, %s54
    %v56 = vld [vmem:[%s55] sm:%s3]
    %s57 = scalar_lea.vmem [#allocation0], 168
    %58 = vst [vmem:[%s57] sm:%s3] %v56
    %s59 = smul.addr 4, 20
    %s60 = scalar_lea.vmem %s0, %s59
    %v61 = vld [vmem:[%s60] sm:%s3]
    %s62 = scalar_lea.vmem [#allocation0], 160
    %63 = vst [vmem:[%s62] sm:%s3] %v61
    %s64 = smul.addr 4, 19
    %s65 = scalar_lea.vmem %s0, %s64
    %v66 = vld [vmem:[%s65] sm:%s3]
    %s67 = scalar_lea.vmem [#allocation0], 152
    %68 = vst [vmem:[%s67] sm:%s3] %v66
    %s69 = smul.addr 4, 18
    %s70 = scalar_lea.vmem %s0, %s69
    %v71 = vld [vmem:[%s70] sm:%s3]
    %s72 = scalar_lea.vmem [#allocation0], 144
    %73 = vst [vmem:[%s72] sm:%s3] %v71
    %s74 = smul.addr 4, 17
    %s75 = scalar_lea.vmem %s0, %s74
    %v76 = vld [vmem:[%s75] sm:%s3]
    %s77 = scalar_lea.vmem [#allocation0], 136
    %78 = vst [vmem:[%s77] sm:%s3] %v76
    %s79 = smul.addr 4, 16
    %s80 = scalar_lea.vmem %s0, %s79
    %v81 = vld [vmem:[%s80] sm:%s3]
    %s82 = scalar_lea.vmem [#allocation0], 128
    %83 = vst [vmem:[%s82] sm:%s3] %v81
    %s84 = smul.addr 4, 15
    %s85 = scalar_lea.vmem %s0, %s84
    %v86 = vld [vmem:[%s85] sm:%s3]
    %s87 = scalar_lea.vmem [#allocation0], 120
    %88 = vst [vmem:[%s87] sm:%s3] %v86
    %s89 = smul.addr 4, 14
    %s90 = scalar_lea.vmem %s0, %s89
    %v91 = vld [vmem:[%s90] sm:%s3]
    %s92 = scalar_lea.vmem [#allocation0], 112
    %93 = vst [vmem:[%s92] sm:%s3] %v91
    %s94 = smul.addr 4, 13
    %s95 = scalar_lea.vmem %s0, %s94
    %v96 = vld [vmem:[%s95] sm:%s3]
    %s97 = scalar_lea.vmem [#allocation0], 104
    %98 = vst [vmem:[%s97] sm:%s3] %v96
    %s99 = smul.addr 4, 12
    %s100 = scalar_lea.vmem %s0, %s99
    %v101 = vld [vmem:[%s100] sm:%s3]
    %s102 = scalar_lea.vmem [#allocation0], 96
    %103 = vst [vmem:[%s102] sm:%s3] %v101
    %s104 = smul.addr 4, 11
    %s105 = scalar_lea.vmem %s0, %s104
    %v106 = vld [vmem:[%s105] sm:%s3]
    %s107 = scalar_lea.vmem [#allocation0], 88
    %108 = vst [vmem:[%s107] sm:%s3] %v106
    %s109 = smul.addr 4, 10
    %s110 = scalar_lea.vmem %s0, %s109
    %v111 = vld [vmem:[%s110] sm:%s3]
    %s112 = scalar_lea.vmem [#allocation0], 80
    %113 = vst [vmem:[%s112] sm:%s3] %v111
    %s114 = smul.addr 4, 9
    %s115 = scalar_lea.vmem %s0, %s114
    %v116 = vld [vmem:[%s115] sm:%s3]
    %s117 = scalar_lea.vmem [#allocation0], 72
    %118 = vst [vmem:[%s117] sm:%s3] %v116
    %s119 = smul.addr 4, 8
    %s120 = scalar_lea.vmem %s0, %s119
    %v121 = vld [vmem:[%s120] sm:%s3]
    %s122 = scalar_lea.vmem [#allocation0], 64
    %123 = vst [vmem:[%s122] sm:%s3] %v121
    %s124 = smul.addr 4, 7
    %s125 = scalar_lea.vmem %s0, %s124
    %v126 = vld [vmem:[%s125] sm:%s3]
    %s127 = scalar_lea.vmem [#allocation0], 56
    %128 = vst [vmem:[%s127] sm:%s3] %v126
    %s129 = smul.addr 4, 6
    %s130 = scalar_lea.vmem %s0, %s129
    %v131 = vld [vmem:[%s130] sm:%s3]
    %s132 = scalar_lea.vmem [#allocation0], 48
    %133 = vst [vmem:[%s132] sm:%s3] %v131
    %s134 = smul.addr 4, 5
    %s135 = scalar_lea.vmem %s0, %s134
    %v136 = vld [vmem:[%s135] sm:%s3]
    %s137 = scalar_lea.vmem [#allocation0], 40
    %138 = vst [vmem:[%s137] sm:%s3] %v136
    %s139 = smul.addr 4, 4
    %s140 = scalar_lea.vmem %s0, %s139
    %v141 = vld [vmem:[%s140] sm:%s3]
    %s142 = scalar_lea.vmem [#allocation0], 32
    %143 = vst [vmem:[%s142] sm:%s3] %v141
    %s144 = smul.addr 4, 3
    %s145 = scalar_lea.vmem %s0, %s144
    %v146 = vld [vmem:[%s145] sm:%s3]
    %s147 = scalar_lea.vmem [#allocation0], 24
    %148 = vst [vmem:[%s147] sm:%s3] %v146
    %s149 = smul.addr 4, 2
    %s150 = scalar_lea.vmem %s0, %s149
    %v151 = vld [vmem:[%s150] sm:%s3]
    %s152 = scalar_lea.vmem [#allocation0], 16
    %153 = vst [vmem:[%s152] sm:%s3] %v151
    %s154 = scalar_lea.vmem %s0, 4
    %v155 = vld [vmem:[%s154] sm:%s3]
    %s156 = scalar_lea.vmem [#allocation0], 8
    %157 = vst [vmem:[%s156] sm:%s3] %v155
    %v158 = vld [vmem:[%s0] sm:%s3]
    %159 = vst [vmem:[#allocation0] sm:%s3] %v158
    %v160 = vld [vmem:[#allocation0] ss:$8 sm:$0xf]
    %v161 = vld [vmem:[#allocation0] ss:$8 sm:$0xf0]
    %vm162 = vcmask 1047556
    %v163 = vsel %vm162, %v161, %v160
    %vm164 = vcmask 261120
    %165 = vst.msk [vmem:[%s1] sm:$0xff] %vm164, %v163
    %s166 = scalar_lea.vmem [#allocation0], 64
    %v167 = vld [vmem:[%s166] ss:$8 sm:$0xf]
    %s168 = scalar_lea.vmem [#allocation0], 64
    %v169 = vld [vmem:[%s168] ss:$8 sm:$0xf0]
    %vm170 = vcmask 1047556
    %v171 = vsel %vm170, %v169, %v167
    %vm172 = vcmask 261120
    %s173 = scalar_lea.vmem %s1, 8
    %174 = vst.msk [vmem:[%s173] sm:$0xff] %vm172, %v171
    %s175 = scalar_lea.vmem [#allocation0], 128
    %v176 = vld [vmem:[%s175] ss:$8 sm:$0xf]
    %s177 = scalar_lea.vmem [#allocation0], 128
    %v178 = vld [vmem:[%s177] ss:$8 sm:$0xf0]
    %vm179 = vcmask 1047556
    %v180 = vsel %vm179, %v178, %v176
    %vm181 = vcmask 261120
    %s182 = scalar_lea.vmem %s1, 16
    %183 = vst.msk [vmem:[%s182] sm:$0xff] %vm181, %v180
    %s184 = scalar_lea.vmem [#allocation0], 192
    %v185 = vld [vmem:[%s184] ss:$8 sm:$0xf]
    %s186 = scalar_lea.vmem [#allocation0], 192
    %v187 = vld [vmem:[%s186] ss:$8 sm:$0xf0]
    %vm188 = vcmask 1047556
    %v189 = vsel %vm188, %v187, %v185
    %vm190 = vcmask 261120
    %s191 = scalar_lea.vmem %s1, 24
    %192 = vst.msk [vmem:[%s191] sm:$0xff] %vm190, %v189
    %s193 = scalar_lea.vmem [#allocation0], 3
    %v194 = vld [vmem:[%s193] ss:$8 sm:$0xf]
    %s195 = scalar_lea.vmem [#allocation0], 3
    %v196 = vld [vmem:[%s195] ss:$8 sm:$0xf0]
    %vm197 = vcmask 1047556
    %v198 = vsel %vm197, %v196, %v194
    %199 = vrot.lane.b32.xlu0 %v198, 96
    %v200 = vpop.permute.xlu0 %199
    %vm201 = vcmask 1048320
    %202 = vst.msk [vmem:[%s1] sm:$0xff] %vm201, %v200
    %s203 = scalar_lea.vmem [#allocation0], 67
    %v204 = vld [vmem:[%s203] ss:$8 sm:$0xf]
    %s205 = scalar_lea.vmem [#allocation0], 67
    %v206 = vld [vmem:[%s205] ss:$8 sm:$0xf0]
    %vm207 = vcmask 1047556
    %v208 = vsel %vm207, %v206, %v204
    %209 = vrot.lane.b32.xlu0 %v208, 96
    %v210 = vpop.permute.xlu0 %209
    %vm211 = vcmask 1048320
    %s212 = scalar_lea.vmem %s1, 8
    %213 = vst.msk [vmem:[%s212] sm:$0xff] %vm211, %v210
    %s214 = scalar_lea.vmem [#allocation0], 131
    %v215 = vld [vmem:[%s214] ss:$8 sm:$0xf]
    %s216 = scalar_lea.vmem [#allocation0], 131
    %v217 = vld [vmem:[%s216] ss:$8 sm:$0xf0]
    %vm218 = vcmask 1047556
    %v219 = vsel %vm218, %v217, %v215
    %220 = vrot.lane.b32.xlu0 %v219, 96
    %v221 = vpop.permute.xlu0 %220
    %vm222 = vcmask 1048320
    %s223 = scalar_lea.vmem %s1, 16
    %224 = vst.msk [vmem:[%s223] sm:$0xff] %vm222, %v221
    %s225 = scalar_lea.vmem [#allocation0], 195
    %v226 = vld [vmem:[%s225] ss:$8 sm:$0xf]
    %s227 = scalar_lea.vmem [#allocation0], 195
    %v228 = vld [vmem:[%s227] ss:$8 sm:$0xf0]
    %vm229 = vcmask 1047556
    %v230 = vsel %vm229, %v228, %v226
    %231 = vrot.lane.b32.xlu0 %v230, 96
    %v232 = vpop.permute.xlu0 %231
    %vm233 = vcmask 1048320
    %s234 = scalar_lea.vmem %s1, 24
    %235 = vst.msk [vmem:[%s234] sm:$0xff] %vm233, %v232
    %s236 = scalar_lea.vmem [#allocation0], 2
    %v237 = vld [vmem:[%s236] ss:$8 sm:$0xf]
    %s238 = scalar_lea.vmem [#allocation0], 2
    %v239 = vld [vmem:[%s238] ss:$8 sm:$0xf0]
    %vm240 = vcmask 1047556
    %v241 = vsel %vm240, %v239, %v237
    %242 = vrot.lane.b32.xlu0 %v241, 64
    %v243 = vpop.permute.xlu0 %242
    %vm244 = vcmask 785920
    %245 = vst.msk [vmem:[%s1] sm:$0xff] %vm244, %v243
    %s246 = scalar_lea.vmem [#allocation0], 66
    %v247 = vld [vmem:[%s246] ss:$8 sm:$0xf]
    %s248 = scalar_lea.vmem [#allocation0], 66
    %v249 = vld [vmem:[%s248] ss:$8 sm:$0xf0]
    %vm250 = vcmask 1047556
    %v251 = vsel %vm250, %v249, %v247
    %252 = vrot.lane.b32.xlu0 %v251, 64
    %v253 = vpop.permute.xlu0 %252
    %vm254 = vcmask 785920
    %s255 = scalar_lea.vmem %s1, 8
    %256 = vst.msk [vmem:[%s255] sm:$0xff] %vm254, %v253
    %s257 = scalar_lea.vmem [#allocation0], 130
    %v258 = vld [vmem:[%s257] ss:$8 sm:$0xf]
    %s259 = scalar_lea.vmem [#allocation0], 130
    %v260 = vld [vmem:[%s259] ss:$8 sm:$0xf0]
    %vm261 = vcmask 1047556
    %v262 = vsel %vm261, %v260, %v258
    %263 = vrot.lane.b32.xlu0 %v262, 64
    %v264 = vpop.permute.xlu0 %263
    %vm265 = vcmask 785920
    %s266 = scalar_lea.vmem %s1, 16
    %267 = vst.msk [vmem:[%s266] sm:$0xff] %vm265, %v264
    %s268 = scalar_lea.vmem [#allocation0], 194
    %v269 = vld [vmem:[%s268] ss:$8 sm:$0xf]
    %s270 = scalar_lea.vmem [#allocation0], 194
    %v271 = vld [vmem:[%s270] ss:$8 sm:$0xf0]
    %vm272 = vcmask 1047556
    %v273 = vsel %vm272, %v271, %v269
    %274 = vrot.lane.b32.xlu0 %v273, 64
    %v275 = vpop.permute.xlu0 %274
    %vm276 = vcmask 785920
    %s277 = scalar_lea.vmem %s1, 24
    %278 = vst.msk [vmem:[%s277] sm:$0xff] %vm276, %v275
    %s279 = scalar_lea.vmem [#allocation0], 1
    %v280 = vld [vmem:[%s279] ss:$8 sm:$0xf]
    %s281 = scalar_lea.vmem [#allocation0], 1
    %v282 = vld [vmem:[%s281] ss:$8 sm:$0xf0]
    %vm283 = vcmask 1047556
    %v284 = vsel %vm283, %v282, %v280
    %285 = vrot.lane.b32.xlu0 %v284, 32
    %v286 = vpop.permute.xlu0 %285
    %vm287 = vcmask 523520
    %288 = vst.msk [vmem:[%s1] sm:$0xff] %vm287, %v286
    %s289 = scalar_lea.vmem [#allocation0], 65
    %v290 = vld [vmem:[%s289] ss:$8 sm:$0xf]
    %s291 = scalar_lea.vmem [#allocation0], 65
    %v292 = vld [vmem:[%s291] ss:$8 sm:$0xf0]
    %vm293 = vcmask 1047556
    %v294 = vsel %vm293, %v292, %v290
    %295 = vrot.lane.b32.xlu0 %v294, 32
    %v296 = vpop.permute.xlu0 %295
    %vm297 = vcmask 523520
    %s298 = scalar_lea.vmem %s1, 8
    %299 = vst.msk [vmem:[%s298] sm:$0xff] %vm297, %v296
    %s300 = scalar_lea.vmem [#allocation0], 129
    %v301 = vld [vmem:[%s300] ss:$8 sm:$0xf]
    %s302 = scalar_lea.vmem [#allocation0], 129
    %v303 = vld [vmem:[%s302] ss:$8 sm:$0xf0]
    %vm304 = vcmask 1047556
    %v305 = vsel %vm304, %v303, %v301
    %306 = vrot.lane.b32.xlu0 %v305, 32
    %v307 = vpop.permute.xlu0 %306
    %vm308 = vcmask 523520
    %s309 = scalar_lea.vmem %s1, 16
    %310 = vst.msk [vmem:[%s309] sm:$0xff] %vm308, %v307
    %s311 = scalar_lea.vmem [#allocation0], 193
    %v312 = vld [vmem:[%s311] ss:$8 sm:$0xf]
    %s313 = scalar_lea.vmem [#allocation0], 193
    %v314 = vld [vmem:[%s313] ss:$8 sm:$0xf0]
    %vm315 = vcmask 1047556
    %v316 = vsel %vm315, %v314, %v312
    %317 = vrot.lane.b32.xlu0 %v316, 32
    %v318 = vpop.permute.xlu0 %317
    %vm319 = vcmask 523520
    %s320 = scalar_lea.vmem %s1, 24
    %321 = vst.msk [vmem:[%s320] sm:$0xff] %vm319, %v318

// kernel: fgctrl_clip_sam_forward.1
$region0: #{fgctrl_clip_sam_forward.1}
  #allocation0 [shape = 'u32[]', space=smem, size = 0x4, offset = 0x4, fixed_abs, tag = 'smem constant byte address 0x4 - core index']
  #allocation1 [shape = 'u32[144,128]{1,0:T(1,128)}', space=vmem, size = 0x12000, scoped, tag = 'internal scratch']
  %s0 = inlined_call_operand.vmem [shape: f32[2,504], index: 0, kind: input, shape index: {}]
  %s1 = inlined_call_operand.vmem [shape: f32[2,128], index: 1, kind: input, shape index: {}]
  %s2 = inlined_call_operand.vmem [shape: f32[2,32], index: 2, kind: input, shape index: {}]
  %s3 = inlined_call_operand.vmem [shape: f32[504,128], index: 3, kind: input, shape index: {}]
  %s4 = inlined_call_operand.vmem [shape: f32[128,128], index: 4, kind: input, shape index: {}]
  %s5 = inlined_call_operand.vmem [shape: f32[32,128], index: 5, kind: input, shape index: {}]
  %s6 = inlined_call_operand.vmem [shape: f32[1,128], index: 6, kind: input, shape index: {}]
  %s7 = inlined_call_operand.vmem [shape: f32[128,128], index: 7, kind: input, shape index: {}]
  %s8 = inlined_call_operand.vmem [shape: f32[1,128], index: 8, kind: input, shape index: {}]
  %s9 = inlined_call_operand.vmem [shape: f32[128,256], index: 9, kind: input, shape index: {}]
  %s10 = inlined_call_operand.vmem [shape: f32[1,256], index: 10, kind: input, shape index: {}]
  %s11 = inlined_call_operand.vmem [shape: f32[2,128], index: 11, kind: output, shape index: {0}]
  %s12 = inlined_call_operand.vmem [shape: s8[2,256], index: 12, kind: output, shape index: {1}]
  %13 = xla_tuple %s11, %s12
  %s14 = sld [smem:[#allocation0]]
  $region62: #{fgctrl_clip_sam_forward.1} parent=0
    _
  %s16 = ssub.s32 1, %s14
  %s17 = scalar_select 0, %s16, %s14
  // Predicated region
  $region2: #{fgctrl_clip_sam_forward.1} parent=0 // pred_check
    _
  $region3: #{fgctrl_clip_sam_forward.1} parent=0 // pred_check_branch
    %19 = sbr.rel (0) target = $region5
  $region4: #{fgctrl_clip_sam_forward.1} parent=0 // pred_region
    _
  $region5: #{fgctrl_clip_sam_forward.1} parent=0 // pred_fallthru
    _
  // Predicated region
  $region6: #{fgctrl_clip_sam_forward.1} parent=0 // pred_check
    _
  $region7: #{fgctrl_clip_sam_forward.1} parent=0 // pred_check_branch
    %21 = sbr.rel (0) target = $region9
  $region8: #{fgctrl_clip_sam_forward.1} parent=0 // pred_region
    _
  $region9: #{fgctrl_clip_sam_forward.1} parent=0 // pred_fallthru
    _
  // Predicated region
  $region10: #{fgctrl_clip_sam_forward.1} parent=0 // pred_check
    _
  $region11: #{fgctrl_clip_sam_forward.1} parent=0 // pred_check_branch
    %23 = sbr.rel (0) target = $region13
  $region12: #{fgctrl_clip_sam_forward.1} parent=0 // pred_region
    _
  $region13: #{fgctrl_clip_sam_forward.1} parent=0 // pred_fallthru
    _
  // Predicated region
  $region14: #{fgctrl_clip_sam_forward.1} parent=0 // pred_check
    _
  $region15: #{fgctrl_clip_sam_forward.1} parent=0 // pred_check_branch
    %25 = sbr.rel (0) target = $region17
  $region16: #{fgctrl_clip_sam_forward.1} parent=0 // pred_region
    _
  $region17: #{fgctrl_clip_sam_forward.1} parent=0 // pred_fallthru
    _
  // Predicated region
  $region18: #{fgctrl_clip_sam_forward.1} parent=0 // pred_check
    _
  $region19: #{fgctrl_clip_sam_forward.1} parent=0 // pred_check_branch
    %27 = sbr.rel (0) target = $region21
  $region20: #{fgctrl_clip_sam_forward.1} parent=0 // pred_region
    _
  $region21: #{fgctrl_clip_sam_forward.1} parent=0 // pred_fallthru
    _
  // Predicated region
  $region22: #{fgctrl_clip_sam_forward.1} parent=0 // pred_check
    _
  $region23: #{fgctrl_clip_sam_forward.1} parent=0 // pred_check_branch
    %29 = sbr.rel (0) target = $region25
  $region24: #{fgctrl_clip_sam_forward.1} parent=0 // pred_region
    _
  $region25: #{fgctrl_clip_sam_forward.1} parent=0 // pred_fallthru
    _
  // Predicated region
  $region26: #{fgctrl_clip_sam_forward.1} parent=0 // pred_check
    _
  $region27: #{fgctrl_clip_sam_forward.1} parent=0 // pred_check_branch
    %31 = sbr.rel (0) target = $region29
  $region28: #{fgctrl_clip_sam_forward.1} parent=0 // pred_region
    _
  $region29: #{fgctrl_clip_sam_forward.1} parent=0 // pred_fallthru
    _
  // Predicated region
  $region30: #{fgctrl_clip_sam_forward.1} parent=0 // pred_check
    _
  $region31: #{fgctrl_clip_sam_forward.1} parent=0 // pred_check_branch
    %33 = sbr.rel (0) target = $region33
  $region32: #{fgctrl_clip_sam_forward.1} parent=0 // pred_region
    _
  $region33: #{fgctrl_clip_sam_forward.1} parent=0 // pred_fallthru
    _
  // Predicated region
  $region34: #{fgctrl_clip_sam_forward.1} parent=0 // pred_check
    _
  $region35: #{fgctrl_clip_sam_forward.1} parent=0 // pred_check_branch
    %35 = sbr.rel (0) target = $region37
  $region36: #{fgctrl_clip_sam_forward.1} parent=0 // pred_region
    _
  $region37: #{fgctrl_clip_sam_forward.1} parent=0 // pred_fallthru
    _
  // Predicated region
  $region38: #{fgctrl_clip_sam_forward.1} parent=0 // pred_check
    _
  $region39: #{fgctrl_clip_sam_forward.1} parent=0 // pred_check_branch
    %37 = sbr.rel (0) target = $region41
  $region40: #{fgctrl_clip_sam_forward.1} parent=0 // pred_region
    _
  $region41: #{fgctrl_clip_sam_forward.1} parent=0 // pred_fallthru
    _
  // Predicated region
  $region42: #{fgctrl_clip_sam_forward.1} parent=0 // pred_check
    _
  $region43: #{fgctrl_clip_sam_forward.1} parent=0 // pred_check_branch
    %39 = sbr.rel (0) target = $region45
  $region44: #{fgctrl_clip_sam_forward.1} parent=0 // pred_region
    _
  $region45: #{fgctrl_clip_sam_forward.1} parent=0 // pred_fallthru
    _
  %v42 = vld [vmem:[%s0] sm:$0xff]
  %v43 = vld [vmem:[%s3] sm:$0xff]
  %v44 = vld [vmem:[%s3 + $0x8] sm:$0xff]
  %v45 = vld [vmem:[%s3 + $0x10] sm:$0xff]
  %v46 = vld [vmem:[%s3 + $0x18] sm:$0xff]
  %v47 = vld [vmem:[%s3 + $0x20] sm:$0xff]
  %v48 = vld [vmem:[%s3 + $0x28] sm:$0xff]
  %v49 = vld [vmem:[%s3 + $0x30] sm:$0xff]
  %v50 = vld [vmem:[%s3 + $0x38] sm:$0xff]
  %v51 = vld [vmem:[%s3 + $0x40] sm:$0xff]
  %v52 = vld [vmem:[%s3 + $0x48] sm:$0xff]
  %v53 = vld [vmem:[%s3 + $0x50] sm:$0xff]
  %v54 = vld [vmem:[%s3 + $0x58] sm:$0xff]
  %v55 = vld [vmem:[%s3 + $0x60] sm:$0xff]
  %v56 = vld [vmem:[%s3 + $0x68] sm:$0xff]
  %v57 = vld [vmem:[%s3 + $0x70] sm:$0xff]
  %v58 = vld [vmem:[%s3 + $0x78] sm:$0xff]
  %v59 = vld [vmem:[%s3 + $0x80] sm:$0xff]
  %v60 = vld [vmem:[%s3 + $0x88] sm:$0xff]
  %v61 = vld [vmem:[%s3 + $0x90] sm:$0xff]
  %v62 = vld [vmem:[%s3 + $0x98] sm:$0xff]
  %v63 = vld [vmem:[%s3 + $0xa0] sm:$0xff]
  %v64 = vld [vmem:[%s3 + $0xa8] sm:$0xff]
  %v65 = vld [vmem:[%s3 + $0xb0] sm:$0xff]
  %v66 = vld [vmem:[%s3 + $0xb8] sm:$0xff]
  %v67 = vld [vmem:[%s3 + $0xc0] sm:$0xff]
  %v68 = vld [vmem:[%s3 + $0xc8] sm:$0xff]
  %v69 = vld [vmem:[%s3 + $0xd0] sm:$0xff]
  %v70 = vld [vmem:[%s3 + $0xd8] sm:$0xff]
  %v71 = vld [vmem:[%s3 + $0xe0] sm:$0xff]
  %v72 = vld [vmem:[%s3 + $0xe8] sm:$0xff]
  %v73 = vld [vmem:[%s3 + $0xf0] sm:$0xff]
  %v74 = vld [vmem:[%s3 + $0xf8] sm:$0xff]
  %v75 = vld [vmem:[%s3 + $0x100] sm:$0xff]
  %v76 = vld [vmem:[%s3 + $0x108] sm:$0xff]
  %v77 = vld [vmem:[%s3 + $0x110] sm:$0xff]
  %v78 = vld [vmem:[%s3 + $0x118] sm:$0xff]
  %v79 = vld [vmem:[%s3 + $0x120] sm:$0xff]
  %v80 = vld [vmem:[%s3 + $0x128] sm:$0xff]
  %v81 = vld [vmem:[%s3 + $0x130] sm:$0xff]
  %v82 = vld [vmem:[%s3 + $0x138] sm:$0xff]
  %v83 = vld [vmem:[%s3 + $0x140] sm:$0xff]
  %v84 = vld [vmem:[%s3 + $0x148] sm:$0xff]
  %v85 = vld [vmem:[%s3 + $0x150] sm:$0xff]
  %v86 = vld [vmem:[%s3 + $0x158] sm:$0xff]
  %v87 = vld [vmem:[%s3 + $0x160] sm:$0xff]
  %v88 = vld [vmem:[%s3 + $0x168] sm:$0xff]
  %v89 = vld [vmem:[%s3 + $0x170] sm:$0xff]
  %v90 = vld [vmem:[%s3 + $0x178] sm:$0xff]
  %v91 = vld [vmem:[%s3 + $0x180] sm:$0xff]
  %v92 = vld [vmem:[%s3 + $0x188] sm:$0xff]
  %v93 = vld [vmem:[%s3 + $0x190] sm:$0xff]
  %v94 = vld [vmem:[%s3 + $0x198] sm:$0xff]
  %v95 = vld [vmem:[%s3 + $0x1a0] sm:$0xff]
  %v96 = vld [vmem:[%s3 + $0x1a8] sm:$0xff]
  %v97 = vld [vmem:[%s3 + $0x1b0] sm:$0xff]
  %v98 = vld [vmem:[%s3 + $0x1b8] sm:$0xff]
  %v99 = vld [vmem:[%s3 + $0x1c0] sm:$0xff]
  %v100 = vld [vmem:[%s3 + $0x1c8] sm:$0xff]
  %v101 = vld [vmem:[%s3 + $0x1d0] sm:$0xff]
  %v102 = vld [vmem:[%s3 + $0x1d8] sm:$0xff]
  %v103 = vld [vmem:[%s3 + $0x1e0] sm:$0xff]
  %v104 = vld [vmem:[%s3 + $0x1e8] sm:$0xff]
  %v105 = vld [vmem:[%s3 + $0x1f0] sm:$0xff]
  %v106 = vld [vmem:[%s1] sm:$0x3]
  %v107 = vld [vmem:[%s4] sm:$0xff]
  %v108 = vld [vmem:[%s4 + $0x8] sm:$0xff]
  %v109 = vld [vmem:[%s4 + $0x10] sm:$0xff]
  %v110 = vld [vmem:[%s4 + $0x18] sm:$0xff]
  %v111 = vld [vmem:[%s4 + $0x20] sm:$0xff]
  %v112 = vld [vmem:[%s4 + $0x28] sm:$0xff]
  %v113 = vld [vmem:[%s4 + $0x30] sm:$0xff]
  %v114 = vld [vmem:[%s4 + $0x38] sm:$0xff]
  %v115 = vld [vmem:[%s4 + $0x40] sm:$0xff]
  %v116 = vld [vmem:[%s4 + $0x48] sm:$0xff]
  %v117 = vld [vmem:[%s4 + $0x50] sm:$0xff]
  %v118 = vld [vmem:[%s4 + $0x58] sm:$0xff]
  %v119 = vld [vmem:[%s4 + $0x60] sm:$0xff]
  %v120 = vld [vmem:[%s4 + $0x68] sm:$0xff]
  %v121 = vld [vmem:[%s4 + $0x70] sm:$0xff]
  %v122 = vld [vmem:[%s4 + $0x78] sm:$0xff]
  %123 = vmatprep.subr.mxu0 0.0
  %124 = vmatpush1.msra.mxu0 %v107
  %125 = vmatprep.subr.mxu0 0.0
  %126 = vmatpush1.msra.mxu0 %v108
  %127 = vmatprep.subr.mxu0 0.0
  %128 = vmatpush1.msra.mxu0 %v109
  %129 = vmatprep.subr.mxu0 0.0
  %130 = vmatpush1.msra.mxu0 %v110
  %131 = vmatprep.subr.mxu0 0.0
  %132 = vmatpush1.msra.mxu0 %v111
  %133 = vmatprep.subr.mxu0 0.0
  %134 = vmatpush1.msra.mxu0 %v112
  %135 = vmatprep.subr.mxu0 0.0
  %136 = vmatpush1.msra.mxu0 %v113
  %137 = vmatprep.subr.mxu0 0.0
  %138 = vmatpush1.msra.mxu0 %v114
  %139 = vmatprep.subr.mxu0 0.0
  %140 = vmatpush1.msra.mxu0 %v115
  %141 = vmatprep.subr.mxu0 0.0
  %142 = vmatpush1.msra.mxu0 %v116
  %143 = vmatprep.subr.mxu0 0.0
  %144 = vmatpush1.msra.mxu0 %v117
  %145 = vmatprep.subr.mxu0 0.0
  %146 = vmatpush1.msra.mxu0 %v118
  %147 = vmatprep.subr.mxu0 0.0
  %148 = vmatpush1.msra.mxu0 %v119
  %149 = vmatprep.subr.mxu0 0.0
  %150 = vmatpush1.msra.mxu0 %v120
  %151 = vmatprep.subr.mxu0 0.0
  %152 = vmatpush1.msra.mxu0 %v121
  %153 = vmatprep.subr.mxu0 0.0
  %154 = vmatpush1.msra.mxu0 %v122
  %155 = vmatprep.subr.mxu0 0.0
  %156 = vmatpush1.msra.mxu0 0.0
  %157 = vmatprep.subr.mxu0 0.0
  %158 = vmatpush1.msra.mxu0 0.0
  %159 = vmatprep.subr.mxu0 0.0
  %160 = vmatpush1.msra.mxu0 0.0
  %161 = vmatprep.subr.mxu0 0.0
  %162 = vmatpush1.msra.mxu0 0.0
  %163 = vmatprep.subr.mxu0 0.0
  %164 = vmatpush1.msra.mxu0 0.0
  %165 = vmatprep.subr.mxu0 0.0
  %166 = vmatpush1.msra.mxu0 0.0
  %167 = vmatprep.subr.mxu0 0.0
  %168 = vmatpush1.msra.mxu0 0.0
  %169 = vmatprep.subr.mxu0 0.0
  %170 = vmatpush1.msra.mxu0 0.0
  %171 = vmatprep.subr.mxu0 0.0
  %172 = vmatpush1.msra.mxu0 0.0
  %173 = vmatprep.subr.mxu0 0.0
  %174 = vmatpush1.msra.mxu0 0.0
  %175 = vmatprep.subr.mxu0 0.0
  %176 = vmatpush1.msra.mxu0 0.0
  %177 = vmatprep.subr.mxu0 0.0
  %178 = vmatpush1.msra.mxu0 0.0
  %179 = vmatprep.subr.mxu0 0.0
  %180 = vmatpush1.msra.mxu0 0.0
  %181 = vmatprep.subr.mxu0 0.0
  %182 = vmatpush1.msra.mxu0 0.0
  %183 = vmatprep.subr.mxu0 0.0
  %184 = vmatpush1.msra.mxu0 0.0
  %185 = vmatprep.subr.mxu0 0.0
  %186 = vmatpush1.msra.mxu0 0.0
  %187 = vmatprep.mubr.f32.mxu0 0.0
  %188 = vmatmul.mubr.f32.gmra.mrb[0].mxu0 %v106
  %v189 = vpop.f32.mrb[0].mxu0
  %v190 = vadd.f32 0.0, %v189
  %v191 = vpop.f32.mrb[0].mxu0
  %192 = vdwg.mxu0
  %v194 = vcombine.high %v42, %v42
  %v196 = vunpack.c.l.s4 1983009808
  %v197 = vunpack.c.0.s8 %v196
  %v198 = vlaneseq
  %v199 = vshrl.u32 %v198, 7
  %v200 = vsub.s32 %v197, %v199
  %v201 = vrot.slane %v42, %v200
  %v203 = vunpack.c.l.s4 1983009808
  %v204 = vunpack.c.0.s8 %v203
  %v205 = vlaneseq
  %v206 = vshrl.u32 %v205, 7
  %v207 = vsub.s32 %v204, %v206
  %v208 = vrot.slane %v194, %v207
  %v209 = vcombine.high %v201, %v201
  %v210 = vcombine.high %v208, %v208
  %vm214 = vcmask 982016
  %v215 = vsel %vm214, %v210, 0
  %217 = vmatprep.subr.mxu0 0.0
  %218 = vmatpush1.msra.mxu0 %v43
  %219 = vmatprep.subr.mxu0 0.0
  %220 = vmatpush1.msra.mxu0 %v44
  %221 = vmatprep.subr.mxu0 0.0
  %222 = vmatpush1.msra.mxu0 %v45
  %223 = vmatprep.subr.mxu0 0.0
  %224 = vmatpush1.msra.mxu0 %v46
  %225 = vmatprep.subr.mxu0 0.0
  %226 = vmatpush1.msra.mxu0 %v47
  %227 = vmatprep.subr.mxu0 0.0
  %228 = vmatpush1.msra.mxu0 %v48
  %229 = vmatprep.subr.mxu0 0.0
  %230 = vmatpush1.msra.mxu0 %v49
  %231 = vmatprep.subr.mxu0 0.0
  %232 = vmatpush1.msra.mxu0 %v50
  %233 = vmatprep.subr.mxu0 0.0
  %234 = vmatpush1.msra.mxu0 %v51
  %235 = vmatprep.subr.mxu0 0.0
  %236 = vmatpush1.msra.mxu0 %v52
  %237 = vmatprep.subr.mxu0 0.0
  %238 = vmatpush1.msra.mxu0 %v53
  %239 = vmatprep.subr.mxu0 0.0
  %240 = vmatpush1.msra.mxu0 %v54
  %241 = vmatprep.subr.mxu0 0.0
  %242 = vmatpush1.msra.mxu0 %v55
  %243 = vmatprep.subr.mxu0 0.0
  %244 = vmatpush1.msra.mxu0 %v56
  %245 = vmatprep.subr.mxu0 0.0
  %246 = vmatpush1.msra.mxu0 %v57
  %247 = vmatprep.subr.mxu0 0.0
  %248 = vmatpush1.msra.mxu0 %v58
  %249 = vmatprep.subr.mxu0 0.0
  %250 = vmatpush1.msra.mxu0 %v59
  %251 = vmatprep.subr.mxu0 0.0
  %252 = vmatpush1.msra.mxu0 %v60
  %253 = vmatprep.subr.mxu0 0.0
  %254 = vmatpush1.msra.mxu0 %v61
  %255 = vmatprep.subr.mxu0 0.0
  %256 = vmatpush1.msra.mxu0 %v62
  %257 = vmatprep.subr.mxu0 0.0
  %258 = vmatpush1.msra.mxu0 %v63
  %259 = vmatprep.subr.mxu0 0.0
  %260 = vmatpush1.msra.mxu0 %v64
  %261 = vmatprep.subr.mxu0 0.0
  %262 = vmatpush1.msra.mxu0 %v65
  %263 = vmatprep.subr.mxu0 0.0
  %264 = vmatpush1.msra.mxu0 %v66
  %265 = vmatprep.subr.mxu0 0.0
  %266 = vmatpush1.msra.mxu0 %v67
  %267 = vmatprep.subr.mxu0 0.0
  %268 = vmatpush1.msra.mxu0 %v68
  %269 = vmatprep.subr.mxu0 0.0
  %270 = vmatpush1.msra.mxu0 %v69
  %271 = vmatprep.subr.mxu0 0.0
  %272 = vmatpush1.msra.mxu0 %v70
  %273 = vmatprep.subr.mxu0 0.0
  %274 = vmatpush1.msra.mxu0 %v71
  %275 = vmatprep.subr.mxu0 0.0
  %276 = vmatpush1.msra.mxu0 %v72
  %277 = vmatprep.subr.mxu0 0.0
  %278 = vmatpush1.msra.mxu0 %v73
  %279 = vmatprep.subr.mxu0 0.0
  %280 = vmatpush1.msra.mxu0 %v74
  %281 = vmatprep.mubr.f32.mxu0 %v209
  %282 = vmatmul.mubr.f32.gmra.mrb[0].mxu0 %v201
  %v283 = vpop.f32.mrb[0].mxu0
  %v284 = vadd.f32 %v190, %v283
  %v285 = vpop.f32.mrb[0].mxu0
  %286 = vdwg.mxu0
  %287 = vmatprep.subr.mxu0 0.0
  %288 = vmatpush1.msra.mxu0 %v75
  %289 = vmatprep.subr.mxu0 0.0
  %290 = vmatpush1.msra.mxu0 %v76
  %291 = vmatprep.subr.mxu0 0.0
  %292 = vmatpush1.msra.mxu0 %v77
  %293 = vmatprep.subr.mxu0 0.0
  %294 = vmatpush1.msra.mxu0 %v78
  %295 = vmatprep.subr.mxu0 0.0
  %296 = vmatpush1.msra.mxu0 %v79
  %297 = vmatprep.subr.mxu0 0.0
  %298 = vmatpush1.msra.mxu0 %v80
  %299 = vmatprep.subr.mxu0 0.0
  %300 = vmatpush1.msra.mxu0 %v81
  %301 = vmatprep.subr.mxu0 0.0
  %302 = vmatpush1.msra.mxu0 %v82
  %303 = vmatprep.subr.mxu0 0.0
  %304 = vmatpush1.msra.mxu0 %v83
  %305 = vmatprep.subr.mxu0 0.0
  %306 = vmatpush1.msra.mxu0 %v84
  %307 = vmatprep.subr.mxu0 0.0
  %308 = vmatpush1.msra.mxu0 %v85
  %309 = vmatprep.subr.mxu0 0.0
  %310 = vmatpush1.msra.mxu0 %v86
  %311 = vmatprep.subr.mxu0 0.0
  %312 = vmatpush1.msra.mxu0 %v87
  %313 = vmatprep.subr.mxu0 0.0
  %314 = vmatpush1.msra.mxu0 %v88
  %315 = vmatprep.subr.mxu0 0.0
  %316 = vmatpush1.msra.mxu0 %v89
  %317 = vmatprep.subr.mxu0 0.0
  %318 = vmatpush1.msra.mxu0 %v90
  %319 = vmatprep.subr.mxu0 0.0
  %320 = vmatpush1.msra.mxu0 %v91
  %321 = vmatprep.subr.mxu0 0.0
  %322 = vmatpush1.msra.mxu0 %v92
  %323 = vmatprep.subr.mxu0 0.0
  %324 = vmatpush1.msra.mxu0 %v93
  %325 = vmatprep.subr.mxu0 0.0
  %326 = vmatpush1.msra.mxu0 %v94
  %327 = vmatprep.subr.mxu0 0.0
  %328 = vmatpush1.msra.mxu0 %v95
  %329 = vmatprep.subr.mxu0 0.0
  %330 = vmatpush1.msra.mxu0 %v96
  %331 = vmatprep.subr.mxu0 0.0
  %332 = vmatpush1.msra.mxu0 %v97
  %333 = vmatprep.subr.mxu0 0.0
  %334 = vmatpush1.msra.mxu0 %v98
  %335 = vmatprep.subr.mxu0 0.0
  %336 = vmatpush1.msra.mxu0 %v99
  %337 = vmatprep.subr.mxu0 0.0
  %338 = vmatpush1.msra.mxu0 %v100
  %339 = vmatprep.subr.mxu0 0.0
  %340 = vmatpush1.msra.mxu0 %v101
  %341 = vmatprep.subr.mxu0 0.0
  %342 = vmatpush1.msra.mxu0 %v102
  %343 = vmatprep.subr.mxu0 0.0
  %344 = vmatpush1.msra.mxu0 %v103
  %345 = vmatprep.subr.mxu0 0.0
  %346 = vmatpush1.msra.mxu0 %v104
  %347 = vmatprep.subr.mxu0 0.0
  %348 = vmatpush1.msra.mxu0 %v105
  %349 = vmatprep.subr.mxu0 0.0
  %350 = vmatpush1.msra.mxu0 0.0
  %351 = vmatprep.mubr.f32.mxu0 %v215
  %352 = vmatmul.mubr.f32.gmra.mrb[0].mxu0 %v208
  %v353 = vpop.f32.mrb[0].mxu0
  %v354 = vadd.f32 %v284, %v353
  %v355 = vpop.f32.mrb[0].mxu0
  %356 = vdwg.mxu0
  %v357 = vld [vmem:[%s2] sm:$0x3]
  %v358 = vld [vmem:[%s5] sm:$0xff]
  %v359 = vld [vmem:[%s5 + $0x8] sm:$0xff]
  %v360 = vld [vmem:[%s5 + $0x10] sm:$0xff]
  %v361 = vld [vmem:[%s5 + $0x18] sm:$0xff]
  %vm362 = vcmask 261120
  %v364 = vsel %vm362, %v357, 0
  %366 = vmatprep.subr.mxu0 0.0
  %367 = vmatpush1.msra.mxu0 %v358
  %368 = vmatprep.subr.mxu0 0.0
  %369 = vmatpush1.msra.mxu0 %v359
  %370 = vmatprep.subr.mxu0 0.0
  %371 = vmatpush1.msra.mxu0 %v360
  %372 = vmatprep.subr.mxu0 0.0
  %373 = vmatpush1.msra.mxu0 %v361
  %374 = vmatprep.subr.mxu0 0.0
  %375 = vmatpush1.msra.mxu0 0.0
  %376 = vmatprep.subr.mxu0 0.0
  %377 = vmatpush1.msra.mxu0 0.0
  %378 = vmatprep.subr.mxu0 0.0
  %379 = vmatpush1.msra.mxu0 0.0
  %380 = vmatprep.subr.mxu0 0.0
  %381 = vmatpush1.msra.mxu0 0.0
  %382 = vmatprep.subr.mxu0 0.0
  %383 = vmatpush1.msra.mxu0 0.0
  %384 = vmatprep.subr.mxu0 0.0
  %385 = vmatpush1.msra.mxu0 0.0
  %386 = vmatprep.subr.mxu0 0.0
  %387 = vmatpush1.msra.mxu0 0.0
  %388 = vmatprep.subr.mxu0 0.0
  %389 = vmatpush1.msra.mxu0 0.0
  %390 = vmatprep.subr.mxu0 0.0
  %391 = vmatpush1.msra.mxu0 0.0
  %392 = vmatprep.subr.mxu0 0.0
  %393 = vmatpush1.msra.mxu0 0.0
  %394 = vmatprep.subr.mxu0 0.0
  %395 = vmatpush1.msra.mxu0 0.0
  %396 = vmatprep.subr.mxu0 0.0
  %397 = vmatpush1.msra.mxu0 0.0
  %398 = vmatprep.subr.mxu0 0.0
  %399 = vmatpush1.msra.mxu0 0.0
  %400 = vmatprep.subr.mxu0 0.0
  %401 = vmatpush1.msra.mxu0 0.0
  %402 = vmatprep.subr.mxu0 0.0
  %403 = vmatpush1.msra.mxu0 0.0
  %404 = vmatprep.subr.mxu0 0.0
  %405 = vmatpush1.msra.mxu0 0.0
  %406 = vmatprep.subr.mxu0 0.0
  %407 = vmatpush1.msra.mxu0 0.0
  %408 = vmatprep.subr.mxu0 0.0
  %409 = vmatpush1.msra.mxu0 0.0
  %410 = vmatprep.subr.mxu0 0.0
  %411 = vmatpush1.msra.mxu0 0.0
  %412 = vmatprep.subr.mxu0 0.0
  %413 = vmatpush1.msra.mxu0 0.0
  %414 = vmatprep.subr.mxu0 0.0
  %415 = vmatpush1.msra.mxu0 0.0
  %416 = vmatprep.subr.mxu0 0.0
  %417 = vmatpush1.msra.mxu0 0.0
  %418 = vmatprep.subr.mxu0 0.0
  %419 = vmatpush1.msra.mxu0 0.0
  %420 = vmatprep.subr.mxu0 0.0
  %421 = vmatpush1.msra.mxu0 0.0
  %422 = vmatprep.subr.mxu0 0.0
  %423 = vmatpush1.msra.mxu0 0.0
  %424 = vmatprep.subr.mxu0 0.0
  %425 = vmatpush1.msra.mxu0 0.0
  %426 = vmatprep.subr.mxu0 0.0
  %427 = vmatpush1.msra.mxu0 0.0
  %428 = vmatprep.subr.mxu0 0.0
  %429 = vmatpush1.msra.mxu0 0.0
  %430 = vmatprep.mubr.f32.mxu0 0.0
  %431 = vmatmul.mubr.f32.gmra.mrb[0].mxu0 %v364
  %v432 = vpop.f32.mrb[0].mxu0
  %v433 = vadd.f32 0.0, %v432
  %v434 = vpop.f32.mrb[0].mxu0
  %435 = vdwg.mxu0
  %v436 = vadd.f32 %v354, %v433
  %v437 = vld [vmem:[%s6] sm:$0x1]
  %v439 = vlaneseq
  %v440 = vshrl.u32 %v439, 7
  %v441 = vsub.s32 0, %v440
  %v442 = vrot.slane %v437, %v441
  %v444 = vadd.f32 %v436, %v442
  %v445 = vld [vmem:[%s7] sm:$0xff]
  %v446 = vld [vmem:[%s7 + $0x8] sm:$0xff]
  %v447 = vld [vmem:[%s7 + $0x10] sm:$0xff]
  %v448 = vld [vmem:[%s7 + $0x18] sm:$0xff]
  %v449 = vld [vmem:[%s7 + $0x20] sm:$0xff]
  %v450 = vld [vmem:[%s7 + $0x28] sm:$0xff]
  %v451 = vld [vmem:[%s7 + $0x30] sm:$0xff]
  %v452 = vld [vmem:[%s7 + $0x38] sm:$0xff]
  %v453 = vld [vmem:[%s7 + $0x40] sm:$0xff]
  %v454 = vld [vmem:[%s7 + $0x48] sm:$0xff]
  %v455 = vld [vmem:[%s7 + $0x50] sm:$0xff]
  %v456 = vld [vmem:[%s7 + $0x58] sm:$0xff]
  %v457 = vld [vmem:[%s7 + $0x60] sm:$0xff]
  %v458 = vld [vmem:[%s7 + $0x68] sm:$0xff]
  %v459 = vld [vmem:[%s7 + $0x70] sm:$0xff]
  %v460 = vld [vmem:[%s7 + $0x78] sm:$0xff]
  %v461 = vld [vmem:[%s8] sm:$0x1]
  %v463 = vlaneseq
  %v464 = vshrl.u32 %v463, 7
  %v465 = vsub.s32 0, %v464
  %v466 = vrot.slane %v461, %v465
  %468 = vmatprep.subr.mxu0 0.0
  %469 = vmatpush1.msra.mxu0 %v445
  %470 = vmatprep.subr.mxu0 0.0
  %471 = vmatpush1.msra.mxu0 %v446
  %472 = vmatprep.subr.mxu0 0.0
  %473 = vmatpush1.msra.mxu0 %v447
  %474 = vmatprep.subr.mxu0 0.0
  %475 = vmatpush1.msra.mxu0 %v448
  %476 = vmatprep.subr.mxu0 0.0
  %477 = vmatpush1.msra.mxu0 %v449
  %478 = vmatprep.subr.mxu0 0.0
  %479 = vmatpush1.msra.mxu0 %v450
  %480 = vmatprep.subr.mxu0 0.0
  %481 = vmatpush1.msra.mxu0 %v451
  %482 = vmatprep.subr.mxu0 0.0
  %483 = vmatpush1.msra.mxu0 %v452
  %484 = vmatprep.subr.mxu0 0.0
  %485 = vmatpush1.msra.mxu0 %v453
  %486 = vmatprep.subr.mxu0 0.0
  %487 = vmatpush1.msra.mxu0 %v454
  %488 = vmatprep.subr.mxu0 0.0
  %489 = vmatpush1.msra.mxu0 %v455
  %490 = vmatprep.subr.mxu0 0.0
  %491 = vmatpush1.msra.mxu0 %v456
  %492 = vmatprep.subr.mxu0 0.0
  %493 = vmatpush1.msra.mxu0 %v457
  %494 = vmatprep.subr.mxu0 0.0
  %495 = vmatpush1.msra.mxu0 %v458
  %496 = vmatprep.subr.mxu0 0.0
  %497 = vmatpush1.msra.mxu0 %v459
  %498 = vmatprep.subr.mxu0 0.0
  %499 = vmatpush1.msra.mxu0 %v460
  %500 = vmatprep.subr.mxu0 0.0
  %501 = vmatpush1.msra.mxu0 0.0
  %502 = vmatprep.subr.mxu0 0.0
  %503 = vmatpush1.msra.mxu0 0.0
  %504 = vmatprep.subr.mxu0 0.0
  %505 = vmatpush1.msra.mxu0 0.0
  %506 = vmatprep.subr.mxu0 0.0
  %507 = vmatpush1.msra.mxu0 0.0
  %508 = vmatprep.subr.mxu0 0.0
  %509 = vmatpush1.msra.mxu0 0.0
  %510 = vmatprep.subr.mxu0 0.0
  %511 = vmatpush1.msra.mxu0 0.0
  %512 = vmatprep.subr.mxu0 0.0
  %513 = vmatpush1.msra.mxu0 0.0
  %514 = vmatprep.subr.mxu0 0.0
  %515 = vmatpush1.msra.mxu0 0.0
  %516 = vmatprep.subr.mxu0 0.0
  %517 = vmatpush1.msra.mxu0 0.0
  %518 = vmatprep.subr.mxu0 0.0
  %519 = vmatpush1.msra.mxu0 0.0
  %520 = vmatprep.subr.mxu0 0.0
  %521 = vmatpush1.msra.mxu0 0.0
  %522 = vmatprep.subr.mxu0 0.0
  %523 = vmatpush1.msra.mxu0 0.0
  %524 = vmatprep.subr.mxu0 0.0
  %525 = vmatpush1.msra.mxu0 0.0
  %526 = vmatprep.subr.mxu0 0.0
  %527 = vmatpush1.msra.mxu0 0.0
  %528 = vmatprep.subr.mxu0 0.0
  %529 = vmatpush1.msra.mxu0 0.0
  %530 = vmatprep.subr.mxu0 0.0
  %531 = vmatpush1.msra.mxu0 0.0
  %532 = vmatprep.mubr.f32.mxu0 0.0
  %533 = vmatmul.mubr.f32.gmra.mrb[0].mxu0 %v444
  %v534 = vpop.f32.mrb[0].mxu0
  %v535 = vadd.f32 %v466, %v534
  %v536 = vpop.f32.mrb[0].mxu0
  %537 = vdwg.mxu0
  %538 = vst [vmem:[%s11] sm:$0x3] %v535
  %v539 = vld [vmem:[%s9] sm:$0xff]
  %v540 = vld [vmem:[%s9 + $0x8] sm:$0xff]
  %v541 = vld [vmem:[%s9 + $0x10] sm:$0xff]
  %v542 = vld [vmem:[%s9 + $0x18] sm:$0xff]
  %v543 = vld [vmem:[%s9 + $0x20] sm:$0xff]
  %v544 = vld [vmem:[%s9 + $0x28] sm:$0xff]
  %v545 = vld [vmem:[%s9 + $0x30] sm:$0xff]
  %v546 = vld [vmem:[%s9 + $0x38] sm:$0xff]
  %v547 = vld [vmem:[%s9 + $0x40] sm:$0xff]
  %v548 = vld [vmem:[%s9 + $0x48] sm:$0xff]
  %v549 = vld [vmem:[%s9 + $0x50] sm:$0xff]
  %v550 = vld [vmem:[%s9 + $0x58] sm:$0xff]
  %v551 = vld [vmem:[%s9 + $0x60] sm:$0xff]
  %v552 = vld [vmem:[%s9 + $0x68] sm:$0xff]
  %v553 = vld [vmem:[%s9 + $0x70] sm:$0xff]
  %v554 = vld [vmem:[%s9 + $0x78] sm:$0xff]
  %v555 = vld [vmem:[%s9 + $0x80] sm:$0xff]
  %v556 = vld [vmem:[%s9 + $0x88] sm:$0xff]
  %v557 = vld [vmem:[%s9 + $0x90] sm:$0xff]
  %v558 = vld [vmem:[%s9 + $0x98] sm:$0xff]
  %v559 = vld [vmem:[%s9 + $0xa0] sm:$0xff]
  %v560 = vld [vmem:[%s9 + $0xa8] sm:$0xff]
  %v561 = vld [vmem:[%s9 + $0xb0] sm:$0xff]
  %v562 = vld [vmem:[%s9 + $0xb8] sm:$0xff]
  %v563 = vld [vmem:[%s9 + $0xc0] sm:$0xff]
  %v564 = vld [vmem:[%s9 + $0xc8] sm:$0xff]
  %v565 = vld [vmem:[%s9 + $0xd0] sm:$0xff]
  %v566 = vld [vmem:[%s9 + $0xd8] sm:$0xff]
  %v567 = vld [vmem:[%s9 + $0xe0] sm:$0xff]
  %v568 = vld [vmem:[%s9 + $0xe8] sm:$0xff]
  %v569 = vld [vmem:[%s9 + $0xf0] sm:$0xff]
  %v570 = vld [vmem:[%s9 + $0xf8] sm:$0xff]
  %v571 = vld [vmem:[%s10] sm:$0x3]
  %v573 = vlaneseq
  %v574 = vshrl.u32 %v573, 7
  %v575 = vsub.s32 0, %v574
  %v576 = vrot.slane %v571, %v575
  %v577 = vlaneseq
  %v578 = vshrl.u32 %v577, 7
  %v579 = vsub.s32 1, %v578
  %v580 = vrot.slane %v571, %v579
  %583 = vmatprep.subr.mxu0 %v540
  %584 = vmatpush1.msra.mxu0 %v539
  %585 = vmatprep.subr.mxu0 %v542
  %586 = vmatpush1.msra.mxu0 %v541
  %587 = vmatprep.subr.mxu0 %v544
  %588 = vmatpush1.msra.mxu0 %v543
  %589 = vmatprep.subr.mxu0 %v546
  %590 = vmatpush1.msra.mxu0 %v545
  %591 = vmatprep.subr.mxu0 %v548
  %592 = vmatpush1.msra.mxu0 %v547
  %593 = vmatprep.subr.mxu0 %v550
  %594 = vmatpush1.msra.mxu0 %v549
  %595 = vmatprep.subr.mxu0 %v552
  %596 = vmatpush1.msra.mxu0 %v551
  %597 = vmatprep.subr.mxu0 %v554
  %598 = vmatpush1.msra.mxu0 %v553
  %599 = vmatprep.subr.mxu0 %v556
  %600 = vmatpush1.msra.mxu0 %v555
  %601 = vmatprep.subr.mxu0 %v558
  %602 = vmatpush1.msra.mxu0 %v557
  %603 = vmatprep.subr.mxu0 %v560
  %604 = vmatpush1.msra.mxu0 %v559
  %605 = vmatprep.subr.mxu0 %v562
  %606 = vmatpush1.msra.mxu0 %v561
  %607 = vmatprep.subr.mxu0 %v564
  %608 = vmatpush1.msra.mxu0 %v563
  %609 = vmatprep.subr.mxu0 %v566
  %610 = vmatpush1.msra.mxu0 %v565
  %611 = vmatprep.subr.mxu0 %v568
  %612 = vmatpush1.msra.mxu0 %v567
  %613 = vmatprep.subr.mxu0 %v570
  %614 = vmatpush1.msra.mxu0 %v569
  %615 = vmatprep.subr.mxu0 0.0
  %616 = vmatpush1.msra.mxu0 0.0
  %617 = vmatprep.subr.mxu0 0.0
  %618 = vmatpush1.msra.mxu0 0.0
  %619 = vmatprep.subr.mxu0 0.0
  %620 = vmatpush1.msra.mxu0 0.0
  %621 = vmatprep.subr.mxu0 0.0
  %622 = vmatpush1.msra.mxu0 0.0
  %623 = vmatprep.subr.mxu0 0.0
  %624 = vmatpush1.msra.mxu0 0.0
  %625 = vmatprep.subr.mxu0 0.0
  %626 = vmatpush1.msra.mxu0 0.0
  %627 = vmatprep.subr.mxu0 0.0
  %628 = vmatpush1.msra.mxu0 0.0
  %629 = vmatprep.subr.mxu0 0.0
  %630 = vmatpush1.msra.mxu0 0.0
  %631 = vmatprep.subr.mxu0 0.0
  %632 = vmatpush1.msra.mxu0 0.0
  %633 = vmatprep.subr.mxu0 0.0
  %634 = vmatpush1.msra.mxu0 0.0
  %635 = vmatprep.subr.mxu0 0.0
  %636 = vmatpush1.msra.mxu0 0.0
  %637 = vmatprep.subr.mxu0 0.0
  %638 = vmatpush1.msra.mxu0 0.0
  %639 = vmatprep.subr.mxu0 0.0
  %640 = vmatpush1.msra.mxu0 0.0
  %641 = vmatprep.subr.mxu0 0.0
  %642 = vmatpush1.msra.mxu0 0.0
  %643 = vmatprep.subr.mxu0 0.0
  %644 = vmatpush1.msra.mxu0 0.0
  %645 = vmatprep.subr.mxu0 0.0
  %646 = vmatpush1.msra.mxu0 0.0
  %647 = vmatprep.mubr.f32.mxu0 0.0
  %648 = vmatmul.mubr.f32.gmra.mrb[0].mxu0 %v444
  %v649 = vpop.f32.mrb[0].mxu0
  %v650 = vadd.f32 %v576, %v649
  %v651 = vpop.f32.mrb[0].mxu0
  %v652 = vadd.f32 %v580, %v651
  %653 = vdwg.mxu0
  %vm654 = vcmp.gt.f32.partialorder %v650, 0.0
  %vm655 = vcmp.gt.f32.partialorder %v652, 0.0
  %vm656 = vmpackc.low %vm654, %vm654
  %vm657 = vmpackc.even %vm656, %vm656
  %vm658 = vmpackc.low %vm655, %vm655
  %vm659 = vmpackc.even %vm658, %vm658
  %v660 = vsel %vm657, 16843009, 0
  %v661 = vsel %vm659, 16843009, 0
  %v662 = vcombine.low %v660, %v661
  %v664 = vunpack.c.l.s4 1966171168
  %v665 = vunpack.c.0.s8 %v664
  %v666 = vlaneseq
  %v667 = vshrl.u32 %v666, 7
  %v668 = vsub.s32 %v665, %v667
  %v669 = vrot.slane %v662, %v668
  %v671 = vunpack.c.l.s4 1966171168
  %v672 = vunpack.c.0.s8 %v671
  %v673 = vlaneseq
  %v674 = vshrl.u32 %v673, 7
  %v675 = vsub.s32 %v672, %v674
  %v676 = vrot.slane %v669, %v675
  %vm677 = vcmask 1040384
  %vm678 = vsmask.f32 256
  %vm679 = vmand %vm677, %vm678
  %vm680 = vcmask 1041409
  %vm681 = vsmask.f32 1280
  %vm682 = vmand %vm680, %vm681
  %vm683 = vmor %vm682, %vm679
  %v684 = vld [vmem:[%s12] sm:$0x3]
  %v685 = vsel %vm683, %v676, %v684
  %686 = vst [vmem:[%s12] sm:$0x3] %v685
  // Predicated region
  $region46: #{fgctrl_clip_sam_forward.1} parent=0 // pred_check
    _
  $region47: #{fgctrl_clip_sam_forward.1} parent=0 // pred_check_branch
    %688 = sbr.rel (0) target = $region49
  $region48: #{fgctrl_clip_sam_forward.1} parent=0 // pred_region
    _
  $region49: #{fgctrl_clip_sam_forward.1} parent=0 // pred_fallthru
    _
  // Predicated region
  $region50: #{fgctrl_clip_sam_forward.1} parent=0 // pred_check
    _
  $region51: #{fgctrl_clip_sam_forward.1} parent=0 // pred_check_branch
    %690 = sbr.rel (0) target = $region53
  $region52: #{fgctrl_clip_sam_forward.1} parent=0 // pred_region
    _
  $region53: #{fgctrl_clip_sam_forward.1} parent=0 // pred_fallthru
    _
  // Predicated region
  $region54: #{fgctrl_clip_sam_forward.1} parent=0 // pred_check
    _
  $region55: #{fgctrl_clip_sam_forward.1} parent=0 // pred_check_branch
    %692 = sbr.rel (0) target = $region57
  $region56: #{fgctrl_clip_sam_forward.1} parent=0 // pred_region
    _
  $region57: #{fgctrl_clip_sam_forward.1} parent=0 // pred_fallthru
    _
  // Predicated region
  $region58: #{fgctrl_clip_sam_forward.1} parent=0 // pred_check
    _
  $region59: #{fgctrl_clip_sam_forward.1} parent=0 // pred_check_branch
    %694 = sbr.rel (0) target = $region61
  $region60: #{fgctrl_clip_sam_forward.1} parent=0 // pred_region
    _
  $region61: #{fgctrl_clip_sam_forward.1} parent=0 // pred_fallthru
    _

</llo_original>
